<compile_context>
chip_gen: v7x
topology: tpu7x:2x2x1
jax: 0.10.0
libtpu: 0.0.40
codegen_flags: <defaults>
</compile_context>

<pallas_src>
import jax
import jax.numpy as jnp
from jax.experimental import pallas as pl
from jax.experimental.pallas import tpu as pltpu


def embedder_kernel(x_ref, w_ref, b_ref, out_ref, acc_ref):
    # x_ref:   (tm, tk)  fused [img_flat | word] features (zero-padded)
    # w_ref:   (tk, E)   fused [w_img ; w_word] weights (zero-padded)
    # b_ref:   (1, E)    bias
    # out_ref: (tm, E)
    # acc_ref: (tm, E)   f32 accumulator, persists across the K grid axis
    k = pl.program_id(1)

    @pl.when(k == 0)
    def _():
        acc_ref[...] = jnp.zeros_like(acc_ref)

    acc_ref[...] += jnp.dot(x_ref[...], w_ref[...],
                            preferred_element_type=jnp.float32)

    @pl.when(k == pl.num_programs(1) - 1)
    def _():
        # Single store per output tile (friendly to v5e's one vector-store slot).
        out_ref[...] = (acc_ref[...] + b_ref[...]).astype(out_ref.dtype)


def embedder_forward(img, word, w_img, w_word, bias, *, tm=None, tk=512):
    """img: (B, C, H, W) float32 (NCHW), word: (B, K_word) float32."""
    B = img.shape[0]
    img_flat = img.reshape(B, -1)                     # glue reshape in plain JAX
    K_img = img_flat.shape[1]
    K_word = word.shape[1]
    E = w_img.shape[1]
    K = K_img + K_word

    # Fuse the two projections into a single lane-dense contraction.
    x = jnp.concatenate([img_flat, word], axis=1)     # (B, K)
    w = jnp.concatenate([w_img, w_word], axis=0)      # (K, E)
    b = bias.reshape(1, E).astype(jnp.float32)

    # Tile sizes: sublane tile tm >= 8; reduction tile tk multiple of 128.
    if tm is None:
        tm = 8 if B <= 8 else 128
    k_rounded = 128 * pl.cdiv(K, 128)
    tk = min(tk, k_rounded)
    K_pad = tk * pl.cdiv(K, tk)
    B_pad = tm * pl.cdiv(B, tm)

    # Zero padding: extra zeros in the contraction do not change the result.
    x = jnp.pad(x, ((0, B_pad - B), (0, K_pad - K)))
    w = jnp.pad(w, ((0, K_pad - K), (0, 0)))

    grid = (B_pad // tm, K_pad // tk)

    cost = pl.CostEstimate(
        flops=2 * B_pad * K_pad * E,
        transcendentals=0,
        bytes_accessed=4 * (K_pad * E + B_pad * K_pad + B_pad * E + E),
    )

    out = pl.pallas_call(
        embedder_kernel,
        out_shape=jax.ShapeDtypeStruct((B_pad, E), jnp.float32),
        grid_spec=pltpu.PrefetchScalarGridSpec(
            num_scalar_prefetch=0,
            grid=grid,
            in_specs=[
                pl.BlockSpec((tm, tk), lambda i, k: (i, k)),   # features
                pl.BlockSpec((tk, E), lambda i, k: (k, 0)),    # fused weights
                pl.BlockSpec((1, E), lambda i, k: (0, 0)),     # bias (constant)
            ],
            out_specs=pl.BlockSpec((tm, E), lambda i, k: (i, 0)),
            scratch_shapes=[pltpu.VMEM((tm, E), jnp.float32)],
        ),
        compiler_params=pltpu.CompilerParams(
            dimension_semantics=("parallel", "arbitrary"),
            vmem_limit_bytes=32 * 1024 * 1024,
        ),
        cost_estimate=cost,
    )(x, w, b)

    return out[:B]


if __name__ == "__main__":
    # Small shapes consistent with the module's (img, word) signature.
    B, C, H, W = 2, 4, 16, 16       # img: NCHW
    K_word = 32                     # word feature dim
    E = 128                         # shared embedding dim (lane-aligned)

    key = jax.random.PRNGKey(0)
    k_img, k_word, k_wi, k_ww, k_b = jax.random.split(key, 5)

    img = jax.random.normal(k_img, (B, C, H, W), dtype=jnp.float32)
    word = jax.random.normal(k_word, (B, K_word), dtype=jnp.float32)

    # Deterministic parameter init (synthetic, no checkpoint).
    K_img = C * H * W
    w_img = jax.random.normal(k_wi, (K_img, E), dtype=jnp.float32) * (K_img ** -0.5)
    w_word = jax.random.normal(k_ww, (K_word, E), dtype=jnp.float32) * (K_word ** -0.5)
    bias = jax.random.normal(k_b, (1, E), dtype=jnp.float32) * 0.01

    out = embedder_forward(img, word, w_img, w_word, bias)
    out = jax.block_until_ready(out)

    # Reference check in plain JAX (same math, f32 throughout).
    ref = img.reshape(B, K_img) @ w_img + word @ w_word + bias
    assert out.shape == (B, E)
    assert jnp.allclose(out, ref, atol=1e-4, rtol=1e-4)

    print("KERNEL_OK")
</pallas_src>

<mosaic_0001>
module attributes {stable_mosaic.version = 11 : i64} {
  func.func @embedder_kernel(%arg0: i32, %arg1: i32, %arg2: memref<8x512xf32, #tpu.memory_space<vmem>>, %arg3: memref<512x128xf32, #tpu.memory_space<vmem>>, %arg4: memref<1x128xf32, #tpu.memory_space<vmem>>, %arg5: memref<8x128xf32, #tpu.memory_space<vmem>>, %arg6: memref<8x128xf32, #tpu.memory_space<vmem>>) attributes {dimension_semantics = [#tpu.dimension_semantics<parallel>, #tpu.dimension_semantics<arbitrary>], iteration_bounds = array<i64: 1, 3>, scalar_prefetch = 0 : i64, scratch_operands = 1 : i64, tpu.core_type = #tpu.core_type<tc>, window_params = [{transform_indices = @transform_0, window_bounds = array<i64: 8, 512>}, {transform_indices = @transform_1, window_bounds = array<i64: 512, 128>}, {pipeline_mode = #tpu.pipeline_mode<synchronous>, transform_indices = @transform_2, window_bounds = array<i64: 1, 128>}, {transform_indices = @transform_3, window_bounds = array<i64: 8, 128>}]} {
    %c0_i32 = arith.constant 0 : i32
    %0 = arith.cmpi eq, %arg1, %c0_i32 : i32
    %1 = arith.extui %0 : i1 to i32
    %c0_i32_0 = arith.constant 0 : i32
    %2 = arith.cmpi ne, %1, %c0_i32_0 : i32
    scf.if %2 {
      %cst_9 = arith.constant 0.000000e+00 : f32
      %12 = vector.broadcast %cst_9 : f32 to vector<8x128xf32>
      %c0_10 = arith.constant 0 : index
      %c0_11 = arith.constant 0 : index
      %13 = vector.load %arg6[%c0_10, %c0_11] : memref<8x128xf32, #tpu.memory_space<vmem>>, vector<8x128xf32>
      tpu.vector_store %arg6[%c0_10, %c0_11], %12 {strides = array<i32>} : memref<8x128xf32, #tpu.memory_space<vmem>>, vector<8x128xf32>,
    } else {
    }
    %c0 = arith.constant 0 : index
    %c0_1 = arith.constant 0 : index
    %3 = vector.load %arg6[%c0, %c0_1] : memref<8x128xf32, #tpu.memory_space<vmem>>, vector<8x128xf32>
    %c0_2 = arith.constant 0 : index
    %c0_3 = arith.constant 0 : index
    %4 = vector.load %arg2[%c0_2, %c0_3] : memref<8x512xf32, #tpu.memory_space<vmem>>, vector<8x512xf32>
    %c0_4 = arith.constant 0 : index
    %c0_5 = arith.constant 0 : index
    %5 = vector.load %arg3[%c0_4, %c0_5] : memref<512x128xf32, #tpu.memory_space<vmem>>, vector<512x128xf32>
    %cst = arith.constant dense<0.000000e+00> : vector<8x128xf32>
    %6 = tpu.matmul %4, %5, %cst {dimension_numbers = #tpu.dot_dimension_numbers<[1], [0], [0], [1], [0, 0, 1, 1], [], []>} : vector<8x512xf32>, vector<512x128xf32>, vector<8x128xf32> -> vector<8x128xf32>
    %7 = arith.addf %3, %6 : vector<8x128xf32>
    %c0_6 = arith.constant 0 : index
    %c0_7 = arith.constant 0 : index
    %8 = vector.load %arg6[%c0_6, %c0_7] : memref<8x128xf32, #tpu.memory_space<vmem>>, vector<8x128xf32>
    tpu.vector_store %arg6[%c0_6, %c0_7], %7 {strides = array<i32>} : memref<8x128xf32, #tpu.memory_space<vmem>>, vector<8x128xf32>,
    %c2_i32 = arith.constant 2 : i32
    %9 = arith.cmpi eq, %arg1, %c2_i32 : i32
    %10 = arith.extui %9 : i1 to i32
    %c0_i32_8 = arith.constant 0 : i32
    %11 = arith.cmpi ne, %10, %c0_i32_8 : i32
    scf.if %11 {
      %c0_9 = arith.constant 0 : index
      %c0_10 = arith.constant 0 : index
      %12 = vector.load %arg6[%c0_9, %c0_10] : memref<8x128xf32, #tpu.memory_space<vmem>>, vector<8x128xf32>
      %c0_11 = arith.constant 0 : index
      %c0_12 = arith.constant 0 : index
      %13 = vector.load %arg4[%c0_11, %c0_12] : memref<1x128xf32, #tpu.memory_space<vmem>>, vector<1x128xf32>
      %14 = vector.broadcast %13 : vector<1x128xf32> to vector<8x128xf32>
      %15 = arith.addf %12, %14 : vector<8x128xf32>
      %c0_13 = arith.constant 0 : index
      %c0_14 = arith.constant 0 : index
      %16 = vector.load %arg5[%c0_13, %c0_14] : memref<8x128xf32, #tpu.memory_space<vmem>>, vector<8x128xf32>
      tpu.vector_store %arg5[%c0_13, %c0_14], %15 {strides = array<i32>} : memref<8x128xf32, #tpu.memory_space<vmem>>, vector<8x128xf32>,
    } else {
    }
    return
  }
  func.func @transform_0(%arg0: i32, %arg1: i32) -> (i32, i32) {
    %c0_i32 = arith.constant 0 : i32
    return %arg0, %arg1 : i32, i32
  }
  func.func @transform_1(%arg0: i32, %arg1: i32) -> (i32, i32) {
    %c0_i32 = arith.constant 0 : i32
    %c0_i32_0 = arith.constant 0 : i32
    return %arg1, %c0_i32 : i32, i32
  }
  func.func @transform_2(%arg0: i32, %arg1: i32) -> (i32, i32) {
    %c0_i32 = arith.constant 0 : i32
    %c0_i32_0 = arith.constant 0 : i32
    %c0_i32_1 = arith.constant 0 : i32
    return %c0_i32, %c0_i32_0 : i32, i32
  }
  func.func @transform_3(%arg0: i32, %arg1: i32) -> (i32, i32) {
    %c0_i32 = arith.constant 0 : i32
    %c0_i32_0 = arith.constant 0 : i32
    return %arg0, %c0_i32 : i32, i32
  }
}

</mosaic_0001>

<llo_original>
// kernel: tpu_custom_call.1
$region0: #{tpu_custom_call.1}
  #allocation0 [shape = 'u32[]', space=smem, size = 0x4, offset = 0x4, fixed_abs, tag = 'smem constant byte address 0x4 - core index']
  #allocation1 [shape = 'u32[144,128]{1,0:T(1,128)}', space=vmem, size = 0x12000, scoped, tag = 'internal scratch']
  #allocation2 [shape = 'f32[8,128]{1,0:T(8,128)}', space=vmem, size = 0x1000, scoped, tag = 'scratch operand']
  %s0 = inlined_call_operand.hbm [shape: f32[8,1536], index: 0, kind: input, shape index: {}]
  %s1 = inlined_call_operand.hbm [shape: f32[1536,128], index: 1, kind: input, shape index: {}]
  %s2 = inlined_call_operand.vmem [shape: f32[1,128], index: 2, kind: input, shape index: {}]
  %s3 = inlined_call_operand.hbm [shape: f32[8,128], index: 3, kind: output, shape index: {}]
  %s4 = sld [smem:[#allocation0]]
  $region61: #{tpu_custom_call.1} parent=0
    _
  %s6 = ssub.s32 1, %s4
  %s7 = scalar_select 0, %s6, %s4
  $region1: #{tpu_custom_call.1} parent=0
    #allocation3 [shape = 'u8[32768]{0}', space=vmem, size = 0x8000, scoped, tag = 'input window, operand 0']
    #allocation4 [shape = 's32[2]{0}', space=sflag, size = 0x8, scoped, tag = 'scoped memory for tpu_custom_call.1']
    #allocation5 [shape = 's32[2]{0}', space=sflag, size = 0x8, scoped, tag = 'scoped memory for tpu_custom_call.1']
    #allocation6 [shape = 'u8[524288]{0}', space=vmem, size = 0x80000, scoped, tag = 'input window, operand 1']
    #allocation7 [shape = 's32[2]{0}', space=sflag, size = 0x8, scoped, tag = 'scoped memory for tpu_custom_call.1']
    #allocation8 [shape = 'u8[4096]{0}', space=vmem, size = 0x1000, scoped, tag = 'output window, operand 0, single buffered']
    %8 = vsyncpa [#allocation4], 0
    %s9 = scalar_lea.sflag [#allocation4], 1
    %10 = vsyncpa %s9, 0
    %11 = vsyncpa [#allocation7], 0
    %s12 = scalar_lea.sflag [#allocation7], 1
    %13 = vsyncpa %s12, 0
    %14 = vsyncpa [#allocation5], 0
    loop: start=0, step=1, limit=5
    $region2: #{tpu_custom_call.1} parent=1 // loop_pre_header
      _
    $region3: #{tpu_custom_call.1} parent=1 // loop_header
      %s16 = sphi 0, %s20
      %p17 = scmp.ge.s32.totalorder %s16, 5
      %s23 = sphi 0, %s35
      %s24 = sphi 0, %s31
      %s25 = sphi 0, %s23
      %s26 = sphi 0, %s24
      %s27 = sphi 0, %s25
      %s28 = sphi 0, %s26
      %s40 = sphi 0, %s42
      %s43 = sphi 0, %s40
      %s44 = sphi 0, %s43
      %s60 = sphi 0, %s44
      %s66 = sphi 0, %s68
      %s69 = sphi 0, %s66
      %s70 = sphi 0, %s69
      %s86 = sphi 0, %s70
      %s90 = sphi 0, %s90
      %s92 = sphi 0, %s90
      %s93 = sphi 0, %s92
      %s107 = sphi 0, %s93
      %s113 = sphi 0, %s115
      %s116 = sphi 0, %s113
      %s117 = sphi 0, %s116
      %s133 = sphi 0, %s117
    $region4: #{tpu_custom_call.1} parent=1 // loop_header_branch
      %19 = sbr.rel (%p17) target = $region8
    $region5: #{tpu_custom_call.1} parent=1 // loop_body
      %s21 = ssub.s32 %s16, 1
      %s22 = ssub.s32 %s16, 2
      %s29 = sadd.s32 1, %s24
      %p30 = scmp.ge.s32.totalorder %s29, 3
      %s31 = scalar_select %p30, 0, %s29
      %s32 = sadd.s32 1, %s23
      %s33 = scalar_select %p30, %s32, %s23
      %p34 = scmp.ge.s32.totalorder %s33, 1
      %s35 = scalar_select %p34, 0, %s33
      %s36 = ssub.s32 %s23, %s35
      %s37 = ssub.s32 %s24, %s31
      %s38 = sor.u32 %s36, %s37
      %p39 = scmp.eq.s32.totalorder %s38, 0
      %s41 = sadd.s32 %s40, 1
      %s42 = scalar_select %p39, %s40, %s41
      %p45 = pneg %p39
      %p46 = scmp.eq.s32.totalorder %s16, 2
      %p47 = por %p45, %p46
      %p48 = scmp.ne.s32.totalorder %s40, %s43
      %p49 = scmp.eq.s32.totalorder %s16, 0
      %p50 = por %p48, %p49
      %p51 = scmp.ne.s32.totalorder %s40, %s43
      %p52 = scmp.eq.s32.totalorder %s21, 2
      %p53 = por %p51, %p52
      %p54 = scmp.ne.s32.totalorder %s43, %s44
      %p55 = scmp.eq.s32.totalorder %s21, 0
      %p56 = por %p54, %p55
      %p57 = scmp.ne.s32.totalorder %s43, %s44
      %p58 = scmp.eq.s32.totalorder %s22, 2
      %p59 = por %p57, %p58
      %p61 = scmp.ne.s32.totalorder %s44, %s60
      %p62 = scmp.eq.s32.totalorder %s22, 0
      %p63 = por %p61, %p62
      %s64 = ssub.s32 %s24, %s31
      %p65 = scmp.eq.s32.totalorder %s64, 0
      %s67 = sadd.s32 %s66, 1
      %s68 = scalar_select %p65, %s66, %s67
      %p71 = pneg %p65
      %p72 = scmp.eq.s32.totalorder %s16, 2
      %p73 = por %p71, %p72
      %p74 = scmp.ne.s32.totalorder %s66, %s69
      %p75 = scmp.eq.s32.totalorder %s16, 0
      %p76 = por %p74, %p75
      %p77 = scmp.ne.s32.totalorder %s66, %s69
      %p78 = scmp.eq.s32.totalorder %s21, 2
      %p79 = por %p77, %p78
      %p80 = scmp.ne.s32.totalorder %s69, %s70
      %p81 = scmp.eq.s32.totalorder %s21, 0
      %p82 = por %p80, %p81
      %p83 = scmp.ne.s32.totalorder %s69, %s70
      %p84 = scmp.eq.s32.totalorder %s22, 2
      %p85 = por %p83, %p84
      %p87 = scmp.ne.s32.totalorder %s70, %s86
      %p88 = scmp.eq.s32.totalorder %s22, 0
      %p89 = por %p87, %p88
      %s91 = sadd.s32 %s90, 1
      %p94 = scmp.eq.s32.totalorder %s16, 2
      %p95 = scmp.ne.s32.totalorder %s90, %s92
      %p96 = scmp.eq.s32.totalorder %s16, 0
      %p97 = por %p95, %p96
      %p98 = scmp.ne.s32.totalorder %s90, %s92
      %p99 = scmp.eq.s32.totalorder %s21, 2
      %p100 = por %p98, %p99
      %p101 = scmp.ne.s32.totalorder %s92, %s93
      %p102 = scmp.eq.s32.totalorder %s21, 0
      %p103 = por %p101, %p102
      %p104 = scmp.ne.s32.totalorder %s92, %s93
      %p105 = scmp.eq.s32.totalorder %s22, 2
      %p106 = por %p104, %p105
      %p108 = scmp.ne.s32.totalorder %s93, %s107
      %p109 = scmp.eq.s32.totalorder %s22, 0
      %p110 = por %p108, %p109
      %s111 = ssub.s32 %s23, %s35
      %p112 = scmp.eq.s32.totalorder %s111, 0
      %s114 = sadd.s32 %s113, 1
      %s115 = scalar_select %p112, %s113, %s114
      %p118 = pneg %p112
      %p119 = scmp.eq.s32.totalorder %s16, 2
      %p120 = por %p118, %p119
      %p121 = scmp.ne.s32.totalorder %s113, %s116
      %p122 = scmp.eq.s32.totalorder %s16, 0
      %p123 = por %p121, %p122
      %p124 = scmp.ne.s32.totalorder %s113, %s116
      %p125 = scmp.eq.s32.totalorder %s21, 2
      %p126 = por %p124, %p125
      %p127 = scmp.ne.s32.totalorder %s116, %s117
      %p128 = scmp.eq.s32.totalorder %s21, 0
      %p129 = por %p127, %p128
      %p130 = scmp.ne.s32.totalorder %s116, %s117
      %p131 = scmp.eq.s32.totalorder %s22, 2
      %p132 = por %p130, %p131
      %p134 = scmp.ne.s32.totalorder %s117, %s133
      %p135 = scmp.eq.s32.totalorder %s22, 0
      %p136 = por %p134, %p135
      %p137 = scmp.le.s32.totalorder 1, %s16
      %p138 = scmp.lt.s32.totalorder %s16, 4
      %p139 = pnand %p137, %p138
      %p140 = pneg %p139
      // Predicated region
      $region9: #{tpu_custom_call.1} parent=5 // pred_check
        _
      $region10: #{tpu_custom_call.1} parent=5 // pred_check_branch
        %142 = sbr.rel (%p139) target = $region12
      $region11: #{tpu_custom_call.1} parent=5 // pred_region
        %s143 = ssub.s32 %s16, 1
        // Predicated region
        $region13: #{tpu_custom_call.1} parent=11 // pred_check
          %p144 = pneg %p103
        $region14: #{tpu_custom_call.1} parent=11 // pred_check_branch
          %146 = sbr.rel (%p144) target = $region16
        $region15: #{tpu_custom_call.1} parent=11 // pred_region
          _
        $region16: #{tpu_custom_call.1} parent=11 // pred_fallthru
          _
      $region12: #{tpu_custom_call.1} parent=5 // pred_fallthru
        _
      %p147 = scmp.lt.s32.totalorder %s16, 3
      // Predicated region
      $region17: #{tpu_custom_call.1} parent=5 // pred_check
        %p148 = pneg %p147
      $region18: #{tpu_custom_call.1} parent=5 // pred_check_branch
        %150 = sbr.rel (%p148) target = $region20
      $region19: #{tpu_custom_call.1} parent=5 // pred_region
        // Predicated region
        $region21: #{tpu_custom_call.1} parent=19 // pred_check
          %p151 = pneg %p50
        $region22: #{tpu_custom_call.1} parent=19 // pred_check_branch
          %153 = sbr.rel (%p151) target = $region24
        $region23: #{tpu_custom_call.1} parent=19 // pred_region
          %s154 = sand.u32 %s40, 1
          %s155 = scalar_lea.sflag [#allocation4], %s154
          %s156 = sand.u32 %s40, 1
          %s157 = smul.addr %s156, 32
          %s158 = scalar_lea.vmem [#allocation3], %s157
          %s159 = smul.u32 4, %s24
          %s161 = ssub.s32 512, 512
          %162 = vsyncadd %s155, %s161
          %s163 = smul.addr %s23, 12
          %s164 = sadd.s32 %s159, %s163
          %s165 = smul.addr %s164, 128
          %s166 = scalar_lea.hbm %s0, %s165
          %s168 = sshll.u32 %s158, 4
          %s169 = int_to_ptr.vmem [resolvable:$true] %s168
          %171 = dma.hbm_to_vmem [thread:$0]  %s166, 512, %s169, %s155
        $region24: #{tpu_custom_call.1} parent=19 // pred_fallthru
          _
        // Predicated region
        $region25: #{tpu_custom_call.1} parent=19 // pred_check
          %p172 = pneg %p76
        $region26: #{tpu_custom_call.1} parent=19 // pred_check_branch
          %174 = sbr.rel (%p172) target = $region28
        $region27: #{tpu_custom_call.1} parent=19 // pred_region
          %s175 = sand.u32 %s66, 1
          %s176 = scalar_lea.sflag [#allocation7], %s175
          %s177 = sand.u32 %s66, 1
          %s178 = smul.addr %s177, 512
          %s179 = scalar_lea.vmem [#allocation6], %s178
          %s180 = smul.u32 64, %s24
          %s182 = ssub.s32 8192, 8192
          %183 = vsyncadd %s176, %s182
          %s184 = smul.addr %s180, 128
          %s185 = scalar_lea.hbm %s1, %s184
          %s186 = sshll.u32 %s179, 4
          %s187 = int_to_ptr.vmem [resolvable:$true] %s186
          %192 = dma.hbm_to_vmem [thread:$0]  %s185, 8192, %s187, %s176, 128, 128, 8
        $region28: #{tpu_custom_call.1} parent=19 // pred_fallthru
          _
      $region20: #{tpu_custom_call.1} parent=5 // pred_fallthru
        _
      %p193 = scmp.le.s32.totalorder 1, %s16
      %p194 = scmp.lt.s32.totalorder %s16, 4
      %p195 = pnand %p193, %p194
      %p196 = pneg %p195
      // Predicated region
      $region29: #{tpu_custom_call.1} parent=5 // pred_check
        _
      $region30: #{tpu_custom_call.1} parent=5 // pred_check_branch
        %198 = sbr.rel (%p195) target = $region32
      $region31: #{tpu_custom_call.1} parent=5 // pred_region
        %s199 = ssub.s32 %s16, 1
        %s200 = sand.u32 %s43, 1
        %s201 = scalar_lea.sflag [#allocation4], %s200
        %s202 = sand.u32 %s43, 1
        %s203 = smul.addr %s202, 32
        %s204 = scalar_lea.vmem [#allocation3], %s203
        // Predicated region
        $region33: #{tpu_custom_call.1} parent=31 // pred_check
          %p205 = pneg %p56
        $region34: #{tpu_custom_call.1} parent=31 // pred_check_branch
          %207 = sbr.rel (%p205) target = $region36
        $region35: #{tpu_custom_call.1} parent=31 // pred_region
          %208 = dma.done %s201, 512
        $region36: #{tpu_custom_call.1} parent=31 // pred_fallthru
          _
        %s209 = sand.u32 %s69, 1
        %s210 = scalar_lea.sflag [#allocation7], %s209
        %s211 = sand.u32 %s69, 1
        %s212 = smul.addr %s211, 512
        %s213 = scalar_lea.vmem [#allocation6], %s212
        // Predicated region
        $region37: #{tpu_custom_call.1} parent=31 // pred_check
          %p214 = pneg %p82
        $region38: #{tpu_custom_call.1} parent=31 // pred_check_branch
          %216 = sbr.rel (%p214) target = $region40
        $region39: #{tpu_custom_call.1} parent=31 // pred_region
          %217 = dma.done %s210, 8192
        $region40: #{tpu_custom_call.1} parent=31 // pred_fallthru
          _
        %s218 = sand.u32 %s43, 1
        %s219 = scalar_lea.sflag [#allocation4], %s218
        %s220 = sand.u32 %s43, 1
        %s221 = smul.addr %s220, 32
        %s222 = scalar_lea.vmem [#allocation3], %s221
        %p223 = pneg %p56
        %p224 = pneg %p53
        %s225 = sand.u32 %s69, 1
        %s226 = scalar_lea.sflag [#allocation7], %s225
        %s227 = sand.u32 %s69, 1
        %s228 = smul.addr %s227, 512
        %s229 = scalar_lea.vmem [#allocation6], %s228
        %p230 = pneg %p82
        %p231 = pneg %p79
        %p232 = pneg %p103
        %p233 = pneg %p100
        %p234 = pneg %p129
        %p235 = pneg %p126
        %s236 = smul.u32 4, %s26
        %s237 = smul.u32 64, %s26
        %p238 = scmp.eq.s32.totalorder %s26, 0
        // Predicated region
        $region41: #{tpu_custom_call.1} parent=31 // pred_check
          %p239 = pneg %p238
        $region42: #{tpu_custom_call.1} parent=31 // pred_check_branch
          %241 = sbr.rel (%p239) target = $region44
        $region43: #{tpu_custom_call.1} parent=31 // pred_region
          %242 = vst [vmem:[#allocation2] sm:$0xff] 0.0
        $region44: #{tpu_custom_call.1} parent=31 // pred_fallthru
          _
        %v243 = vld [vmem:[#allocation2] sm:$0xff]
        %v244 = vld [vmem:[%s204] sm:$0xff]
        %v245 = vld [vmem:[%s204 + $0x8] sm:$0xff]
        %v246 = vld [vmem:[%s204 + $0x10] sm:$0xff]
        %v247 = vld [vmem:[%s204 + $0x18] sm:$0xff]
        %v248 = vld [vmem:[%s213] sm:$0xff]
        %v249 = vld [vmem:[%s213 + $0x8] sm:$0xff]
        %v250 = vld [vmem:[%s213 + $0x10] sm:$0xff]
        %v251 = vld [vmem:[%s213 + $0x18] sm:$0xff]
        %v252 = vld [vmem:[%s213 + $0x20] sm:$0xff]
        %v253 = vld [vmem:[%s213 + $0x28] sm:$0xff]
        %v254 = vld [vmem:[%s213 + $0x30] sm:$0xff]
        %v255 = vld [vmem:[%s213 + $0x38] sm:$0xff]
        %v256 = vld [vmem:[%s213 + $0x40] sm:$0xff]
        %v257 = vld [vmem:[%s213 + $0x48] sm:$0xff]
        %v258 = vld [vmem:[%s213 + $0x50] sm:$0xff]
        %v259 = vld [vmem:[%s213 + $0x58] sm:$0xff]
        %v260 = vld [vmem:[%s213 + $0x60] sm:$0xff]
        %v261 = vld [vmem:[%s213 + $0x68] sm:$0xff]
        %v262 = vld [vmem:[%s213 + $0x70] sm:$0xff]
        %v263 = vld [vmem:[%s213 + $0x78] sm:$0xff]
        %v264 = vld [vmem:[%s213 + $0x80] sm:$0xff]
        %v265 = vld [vmem:[%s213 + $0x88] sm:$0xff]
        %v266 = vld [vmem:[%s213 + $0x90] sm:$0xff]
        %v267 = vld [vmem:[%s213 + $0x98] sm:$0xff]
        %v268 = vld [vmem:[%s213 + $0xa0] sm:$0xff]
        %v269 = vld [vmem:[%s213 + $0xa8] sm:$0xff]
        %v270 = vld [vmem:[%s213 + $0xb0] sm:$0xff]
        %v271 = vld [vmem:[%s213 + $0xb8] sm:$0xff]
        %v272 = vld [vmem:[%s213 + $0xc0] sm:$0xff]
        %v273 = vld [vmem:[%s213 + $0xc8] sm:$0xff]
        %v274 = vld [vmem:[%s213 + $0xd0] sm:$0xff]
        %v275 = vld [vmem:[%s213 + $0xd8] sm:$0xff]
        %v276 = vld [vmem:[%s213 + $0xe0] sm:$0xff]
        %v277 = vld [vmem:[%s213 + $0xe8] sm:$0xff]
        %v278 = vld [vmem:[%s213 + $0xf0] sm:$0xff]
        %v279 = vld [vmem:[%s213 + $0xf8] sm:$0xff]
        %v280 = vld [vmem:[%s213 + $0x100] sm:$0xff]
        %v281 = vld [vmem:[%s213 + $0x108] sm:$0xff]
        %v282 = vld [vmem:[%s213 + $0x110] sm:$0xff]
        %v283 = vld [vmem:[%s213 + $0x118] sm:$0xff]
        %v284 = vld [vmem:[%s213 + $0x120] sm:$0xff]
        %v285 = vld [vmem:[%s213 + $0x128] sm:$0xff]
        %v286 = vld [vmem:[%s213 + $0x130] sm:$0xff]
        %v287 = vld [vmem:[%s213 + $0x138] sm:$0xff]
        %v288 = vld [vmem:[%s213 + $0x140] sm:$0xff]
        %v289 = vld [vmem:[%s213 + $0x148] sm:$0xff]
        %v290 = vld [vmem:[%s213 + $0x150] sm:$0xff]
        %v291 = vld [vmem:[%s213 + $0x158] sm:$0xff]
        %v292 = vld [vmem:[%s213 + $0x160] sm:$0xff]
        %v293 = vld [vmem:[%s213 + $0x168] sm:$0xff]
        %v294 = vld [vmem:[%s213 + $0x170] sm:$0xff]
        %v295 = vld [vmem:[%s213 + $0x178] sm:$0xff]
        %v296 = vld [vmem:[%s213 + $0x180] sm:$0xff]
        %v297 = vld [vmem:[%s213 + $0x188] sm:$0xff]
        %v298 = vld [vmem:[%s213 + $0x190] sm:$0xff]
        %v299 = vld [vmem:[%s213 + $0x198] sm:$0xff]
        %v300 = vld [vmem:[%s213 + $0x1a0] sm:$0xff]
        %v301 = vld [vmem:[%s213 + $0x1a8] sm:$0xff]
        %v302 = vld [vmem:[%s213 + $0x1b0] sm:$0xff]
        %v303 = vld [vmem:[%s213 + $0x1b8] sm:$0xff]
        %v304 = vld [vmem:[%s213 + $0x1c0] sm:$0xff]
        %v305 = vld [vmem:[%s213 + $0x1c8] sm:$0xff]
        %v306 = vld [vmem:[%s213 + $0x1d0] sm:$0xff]
        %v307 = vld [vmem:[%s213 + $0x1d8] sm:$0xff]
        %v308 = vld [vmem:[%s213 + $0x1e0] sm:$0xff]
        %v309 = vld [vmem:[%s213 + $0x1e8] sm:$0xff]
        %v310 = vld [vmem:[%s213 + $0x1f0] sm:$0xff]
        %v311 = vld [vmem:[%s213 + $0x1f8] sm:$0xff]
        %312 = vmatprep.subr.mxu0 0.0
        %313 = vmatpush1.msra.mxu0 %v248
        %314 = vmatprep.subr.mxu0 0.0
        %315 = vmatpush1.msra.mxu0 %v249
        %316 = vmatprep.subr.mxu0 0.0
        %317 = vmatpush1.msra.mxu0 %v250
        %318 = vmatprep.subr.mxu0 0.0
        %319 = vmatpush1.msra.mxu0 %v251
        %320 = vmatprep.subr.mxu0 0.0
        %321 = vmatpush1.msra.mxu0 %v252
        %322 = vmatprep.subr.mxu0 0.0
        %323 = vmatpush1.msra.mxu0 %v253
        %324 = vmatprep.subr.mxu0 0.0
        %325 = vmatpush1.msra.mxu0 %v254
        %326 = vmatprep.subr.mxu0 0.0
        %327 = vmatpush1.msra.mxu0 %v255
        %328 = vmatprep.subr.mxu0 0.0
        %329 = vmatpush1.msra.mxu0 %v256
        %330 = vmatprep.subr.mxu0 0.0
        %331 = vmatpush1.msra.mxu0 %v257
        %332 = vmatprep.subr.mxu0 0.0
        %333 = vmatpush1.msra.mxu0 %v258
        %334 = vmatprep.subr.mxu0 0.0
        %335 = vmatpush1.msra.mxu0 %v259
        %336 = vmatprep.subr.mxu0 0.0
        %337 = vmatpush1.msra.mxu0 %v260
        %338 = vmatprep.subr.mxu0 0.0
        %339 = vmatpush1.msra.mxu0 %v261
        %340 = vmatprep.subr.mxu0 0.0
        %341 = vmatpush1.msra.mxu0 %v262
        %342 = vmatprep.subr.mxu0 0.0
        %343 = vmatpush1.msra.mxu0 %v263
        %344 = vmatprep.subr.mxu0 0.0
        %345 = vmatpush1.msra.mxu0 %v264
        %346 = vmatprep.subr.mxu0 0.0
        %347 = vmatpush1.msra.mxu0 %v265
        %348 = vmatprep.subr.mxu0 0.0
        %349 = vmatpush1.msra.mxu0 %v266
        %350 = vmatprep.subr.mxu0 0.0
        %351 = vmatpush1.msra.mxu0 %v267
        %352 = vmatprep.subr.mxu0 0.0
        %353 = vmatpush1.msra.mxu0 %v268
        %354 = vmatprep.subr.mxu0 0.0
        %355 = vmatpush1.msra.mxu0 %v269
        %356 = vmatprep.subr.mxu0 0.0
        %357 = vmatpush1.msra.mxu0 %v270
        %358 = vmatprep.subr.mxu0 0.0
        %359 = vmatpush1.msra.mxu0 %v271
        %360 = vmatprep.subr.mxu0 0.0
        %361 = vmatpush1.msra.mxu0 %v272
        %362 = vmatprep.subr.mxu0 0.0
        %363 = vmatpush1.msra.mxu0 %v273
        %364 = vmatprep.subr.mxu0 0.0
        %365 = vmatpush1.msra.mxu0 %v274
        %366 = vmatprep.subr.mxu0 0.0
        %367 = vmatpush1.msra.mxu0 %v275
        %368 = vmatprep.subr.mxu0 0.0
        %369 = vmatpush1.msra.mxu0 %v276
        %370 = vmatprep.subr.mxu0 0.0
        %371 = vmatpush1.msra.mxu0 %v277
        %372 = vmatprep.subr.mxu0 0.0
        %373 = vmatpush1.msra.mxu0 %v278
        %374 = vmatprep.subr.mxu0 0.0
        %375 = vmatpush1.msra.mxu0 %v279
        %376 = vmatprep.mubr.f32.mxu0 %v245
        %377 = vmatmul.mubr.f32.gmra.mrb[0].mxu0 %v244
        %v378 = vpop.f32.mrb[0].mxu0
        %v379 = vadd.f32 0.0, %v378
        %v380 = vpop.f32.mrb[0].mxu0
        %381 = vdwg.mxu0
        %382 = vmatprep.subr.mxu0 0.0
        %383 = vmatpush1.msra.mxu0 %v280
        %384 = vmatprep.subr.mxu0 0.0
        %385 = vmatpush1.msra.mxu0 %v281
        %386 = vmatprep.subr.mxu0 0.0
        %387 = vmatpush1.msra.mxu0 %v282
        %388 = vmatprep.subr.mxu0 0.0
        %389 = vmatpush1.msra.mxu0 %v283
        %390 = vmatprep.subr.mxu0 0.0
        %391 = vmatpush1.msra.mxu0 %v284
        %392 = vmatprep.subr.mxu0 0.0
        %393 = vmatpush1.msra.mxu0 %v285
        %394 = vmatprep.subr.mxu0 0.0
        %395 = vmatpush1.msra.mxu0 %v286
        %396 = vmatprep.subr.mxu0 0.0
        %397 = vmatpush1.msra.mxu0 %v287
        %398 = vmatprep.subr.mxu0 0.0
        %399 = vmatpush1.msra.mxu0 %v288
        %400 = vmatprep.subr.mxu0 0.0
        %401 = vmatpush1.msra.mxu0 %v289
        %402 = vmatprep.subr.mxu0 0.0
        %403 = vmatpush1.msra.mxu0 %v290
        %404 = vmatprep.subr.mxu0 0.0
        %405 = vmatpush1.msra.mxu0 %v291
        %406 = vmatprep.subr.mxu0 0.0
        %407 = vmatpush1.msra.mxu0 %v292
        %408 = vmatprep.subr.mxu0 0.0
        %409 = vmatpush1.msra.mxu0 %v293
        %410 = vmatprep.subr.mxu0 0.0
        %411 = vmatpush1.msra.mxu0 %v294
        %412 = vmatprep.subr.mxu0 0.0
        %413 = vmatpush1.msra.mxu0 %v295
        %414 = vmatprep.subr.mxu0 0.0
        %415 = vmatpush1.msra.mxu0 %v296
        %416 = vmatprep.subr.mxu0 0.0
        %417 = vmatpush1.msra.mxu0 %v297
        %418 = vmatprep.subr.mxu0 0.0
        %419 = vmatpush1.msra.mxu0 %v298
        %420 = vmatprep.subr.mxu0 0.0
        %421 = vmatpush1.msra.mxu0 %v299
        %422 = vmatprep.subr.mxu0 0.0
        %423 = vmatpush1.msra.mxu0 %v300
        %424 = vmatprep.subr.mxu0 0.0
        %425 = vmatpush1.msra.mxu0 %v301
        %426 = vmatprep.subr.mxu0 0.0
        %427 = vmatpush1.msra.mxu0 %v302
        %428 = vmatprep.subr.mxu0 0.0
        %429 = vmatpush1.msra.mxu0 %v303
        %430 = vmatprep.subr.mxu0 0.0
        %431 = vmatpush1.msra.mxu0 %v304
        %432 = vmatprep.subr.mxu0 0.0
        %433 = vmatpush1.msra.mxu0 %v305
        %434 = vmatprep.subr.mxu0 0.0
        %435 = vmatpush1.msra.mxu0 %v306
        %436 = vmatprep.subr.mxu0 0.0
        %437 = vmatpush1.msra.mxu0 %v307
        %438 = vmatprep.subr.mxu0 0.0
        %439 = vmatpush1.msra.mxu0 %v308
        %440 = vmatprep.subr.mxu0 0.0
        %441 = vmatpush1.msra.mxu0 %v309
        %442 = vmatprep.subr.mxu0 0.0
        %443 = vmatpush1.msra.mxu0 %v310
        %444 = vmatprep.subr.mxu0 0.0
        %445 = vmatpush1.msra.mxu0 %v311
        %446 = vmatprep.mubr.f32.mxu0 %v247
        %447 = vmatmul.mubr.f32.gmra.mrb[0].mxu0 %v246
        %v448 = vpop.f32.mrb[0].mxu0
        %v449 = vadd.f32 %v379, %v448
        %v450 = vpop.f32.mrb[0].mxu0
        %451 = vdwg.mxu0
        %v452 = vadd.f32 %v243, %v449
        %453 = vst [vmem:[#allocation2] sm:$0xff] %v452
        %p454 = scmp.eq.s32.totalorder %s26, 2
        // Predicated region
        $region45: #{tpu_custom_call.1} parent=31 // pred_check
          %p455 = pneg %p454
        $region46: #{tpu_custom_call.1} parent=31 // pred_check_branch
          %457 = sbr.rel (%p455) target = $region48
        $region47: #{tpu_custom_call.1} parent=31 // pred_region
          %v458 = vld [vmem:[#allocation2] sm:$0xff]
          %v459 = vld [vmem:[%s2] sm:$0x1]
          %v461 = vlaneseq
          %v462 = vshrl.u32 %v461, 7
          %v463 = vsub.s32 0, %v462
          %v464 = vrot.slane %v459, %v463
          %v466 = vadd.f32 %v458, %v464
          %467 = vst [vmem:[#allocation8] sm:$0xff] %v466
        $region48: #{tpu_custom_call.1} parent=31 // pred_fallthru
          _
        // Predicated region
        $region49: #{tpu_custom_call.1} parent=31 // pred_check
          %p468 = pneg %p126
        $region50: #{tpu_custom_call.1} parent=31 // pred_check_branch
          %470 = sbr.rel (%p468) target = $region52
        $region51: #{tpu_custom_call.1} parent=31 // pred_region
          %s472 = ssub.s32 128, 128
          %473 = vsyncadd [#allocation5], %s472
          %s474 = smul.addr %s25, 128
          %s475 = scalar_lea.hbm %s3, %s474
          %s477 = sshll.u32 [#allocation8], 4
          %s478 = int_to_ptr.vmem [resolvable:$true] %s477
          %480 = dma.vmem_to_hbm [thread:$0]  %s478, 128, %s475, [#allocation5]
        $region52: #{tpu_custom_call.1} parent=31 // pred_fallthru
          _
        // Predicated region
        $region53: #{tpu_custom_call.1} parent=31 // pred_check
          %p481 = pneg %p126
        $region54: #{tpu_custom_call.1} parent=31 // pred_check_branch
          %483 = sbr.rel (%p481) target = $region56
        $region55: #{tpu_custom_call.1} parent=31 // pred_region
          %484 = dma.done [#allocation5], 128
        $region56: #{tpu_custom_call.1} parent=31 // pred_fallthru
          _
      $region32: #{tpu_custom_call.1} parent=5 // pred_fallthru
        _
      %p485 = scmp.le.s32.totalorder 2, %s16
      // Predicated region
      $region57: #{tpu_custom_call.1} parent=5 // pred_check
        %p486 = pneg %p485
      $region58: #{tpu_custom_call.1} parent=5 // pred_check_branch
        %488 = sbr.rel (%p486) target = $region60
      $region59: #{tpu_custom_call.1} parent=5 // pred_region
        %s489 = ssub.s32 %s16, 2
      $region60: #{tpu_custom_call.1} parent=5 // pred_fallthru
        _
    $region6: #{tpu_custom_call.1} parent=1 // loop_footer
      %s20 = sadd.s32 1, %s16
    $region7: #{tpu_custom_call.1} parent=1 // loop_footer_branch
      %15 = sbr.rel target = $region3
    $region8: #{tpu_custom_call.1} parent=1 // loop_exit
      _
    %490 = vsyncpa [#allocation4], 1
    %s491 = scalar_lea.sflag [#allocation4], 1
    %492 = vsyncpa %s491, 1
    %493 = vsyncpa [#allocation7], 1
    %s494 = scalar_lea.sflag [#allocation7], 1
    %495 = vsyncpa %s494, 1
    %496 = vsyncpa [#allocation5], 1
    %s497 = scalar_lea.sflag [#allocation5], 1
    %498 = vsyncpa %s497, 1

</llo_original>
